<compile_context>
chip_gen: v7x
topology: tpu7x:2x2x1
jax: 0.10.0
libtpu: 0.0.40
codegen_flags: <defaults>
</compile_context>

<pallas_src>
import jax
import jax.numpy as jnp
from jax.experimental import pallas as pl
from jax.experimental.pallas import tpu as pltpu


def _round_up(x, m):
    return (x + m - 1) // m * m


def _propagator_kernel(ain_ref, aout_ref, s_ref, wa1_ref, wa2_ref,
                       wsrz_ref, wst_ref, b_ref, out_ref):
    D = s_ref.shape[-1]

    s = s_ref[...]                       # (tm, D) native dtype -> MXU operand
    s_f32 = s.astype(jnp.float32)

    # Fused projection of a_in / a_out onto all three gates (N = 3D), with all
    # three biases folded into a single broadcast-add.  f32 accumulation.
    pre_a = jnp.dot(ain_ref[...], wa1_ref[...],
                    preferred_element_type=jnp.float32)
    pre_a = pre_a + jnp.dot(aout_ref[...], wa2_ref[...],
                            preferred_element_type=jnp.float32)
    pre_a = pre_a + b_ref[...].astype(jnp.float32)

    # State contribution for the r and z gates (N = 2D); only the
    # (r*state) @ Wt_s term below depends on r.
    pre_srz = jnp.dot(s, wsrz_ref[...], preferred_element_type=jnp.float32)

    r = jax.nn.sigmoid(pre_a[:, 0:D] + pre_srz[:, 0:D])          # reset gate
    z = jax.nn.sigmoid(pre_a[:, D:2 * D] + pre_srz[:, D:2 * D])  # update gate

    rs = (r * s_f32).astype(s_ref.dtype)
    h_hat = jnp.tanh(
        pre_a[:, 2 * D:3 * D]
        + jnp.dot(rs, wst_ref[...], preferred_element_type=jnp.float32))

    # out = (1-z)*s + z*h_hat, rewritten to save one VPU multiply.
    out_ref[...] = (s_f32 + z * (h_hat - s_f32)).astype(out_ref.dtype)


def pack_propagator_params(params):
    """One-time repack of raw (wr, wz, wt, br, bz, bt) into the kernel layout.

    Call this once at init / checkpoint-load time, NOT per forward call
    (the concatenations are full HBM read+writes of all weights).
    wr/wz/wt are stored pre-transposed: (3D, D) == W_torch.T.
    """
    wr, wz, wt = params["wr"], params["wz"], params["wt"]
    D = wr.shape[1]
    return {
        # a_in's rows of W.T for [r | z | t]          -> (D, 3D)
        "w_a_in": jnp.concatenate([wr[0:D], wz[0:D], wt[0:D]], axis=1),
        # a_out's rows of W.T for [r | z | t]         -> (D, 3D)
        "w_a_out": jnp.concatenate([wr[D:2 * D], wz[D:2 * D], wt[D:2 * D]],
                                   axis=1),
        # state's rows of W.T for [r | z]             -> (D, 2D)
        "w_s_rz": jnp.concatenate([wr[2 * D:], wz[2 * D:]], axis=1),
        # (r*state)'s rows of W.T for t               -> (D, D)
        "w_s_t": wt[2 * D:],
        # fused bias [br | bz | bt]                   -> (1, 3D)
        "b_all": jnp.concatenate([params["br"], params["bz"], params["bt"]],
                                 axis=1),
    }


def propagator_forward(state_cur, a_in, a_out, packed, *, tile_m=1024):
    """state_cur, a_in, a_out: (B, N, D). packed: pack_propagator_params(...).

    Returns (B, N, D)."""
    B, N, D = state_cur.shape
    M = B * N
    dtype = state_cur.dtype
    a_itemsize = jnp.dtype(dtype).itemsize
    w_itemsize = jnp.dtype(packed["w_a_in"].dtype).itemsize

    # Flatten to (M, D) row-major views — pure reshapes, no HBM copies.
    A_in = a_in.reshape(M, D)
    A_out = a_out.reshape(M, D)
    S = state_cur.reshape(M, D)

    # Row tile: big enough to amortize the ~0.35 us/step overhead, small
    # enough that (a) double-buffered row tiles + double-buffered weight
    # blocks fit the VMEM budget and (b) the grid has >= 2 steps so the
    # "parallel" axis can shard across v7x's two TensorCores.
    tm = max(8, min(_round_up(tile_m, 8), _round_up(pl.cdiv(M, 2), 8)))

    w_bytes = (2 * D * 3 * D + D * 2 * D + D * D + 3 * D) * w_itemsize
    budget = 56 * 1024 * 1024   # conservative: leaves headroom under v7x's 64 MiB

    def _vmem_est(t):
        # a_in + a_out + state + out row tiles (double-buffered) + weights
        # (counted double-buffered) + slack for compiler scratch.
        return 2 * (4 * t * D * a_itemsize) + 2 * w_bytes + (1 << 20)

    while tm > 8 and _vmem_est(tm) > budget:
        tm = max(8, _round_up(tm // 2, 8))
    # TODO(synk): for very large D (f32 weights alone ≳ VMEM budget, D ≳ 900),
    # single-buffer the grid-invariant weight blocks or store them in bf16.
    # TODO(synk): for D < 128 the lane/MXU utilization is poor; a block-diagonal
    # repack that groups 128/D rows per lane-tile would fix it (not done here).

    grid = (pl.cdiv(M, tm),)   # ragged last block handled by Pallas masking
    vmem_limit = int(min(budget, max(_vmem_est(tm) + (4 << 20), 32 << 20)))

    row_spec = pl.BlockSpec((tm, D), lambda i: (i, 0))

    out = pl.pallas_call(
        _propagator_kernel,
        out_shape=jax.ShapeDtypeStruct((M, D), dtype),
        grid_spec=pltpu.PrefetchScalarGridSpec(
            num_scalar_prefetch=0,
            grid=grid,
            in_specs=[
                row_spec,                                        # a_in rows
                row_spec,                                        # a_out rows
                row_spec,                                        # state rows
                pl.BlockSpec((D, 3 * D), lambda i: (0, 0)),      # W for a_in
                pl.BlockSpec((D, 3 * D), lambda i: (0, 0)),      # W for a_out
                pl.BlockSpec((D, 2 * D), lambda i: (0, 0)),      # W_s for r,z
                pl.BlockSpec((D, D), lambda i: (0, 0)),          # W_s for t
                pl.BlockSpec((1, 3 * D), lambda i: (0, 0)),      # fused bias
            ],
            out_specs=pl.BlockSpec((tm, D), lambda i: (i, 0)),
        ),
        compiler_params=pltpu.CompilerParams(
            dimension_semantics=("parallel",),
            vmem_limit_bytes=vmem_limit,
        ),
    )(A_in, A_out, S,
      packed["w_a_in"], packed["w_a_out"],
      packed["w_s_rz"], packed["w_s_t"], packed["b_all"])

    return out.reshape(B, N, D)


def init_propagator_params(key, state_dim, dtype=jnp.float32):
    """PyTorch nn.Linear-style init: U(-1/sqrt(fan_in), 1/sqrt(fan_in)).

    Weights are stored pre-transposed: (3*D, D) == W_torch.T.
    Biases stored as (1, D) for in-kernel broadcasting.
    """
    fan_in = 3 * state_dim
    bound = 1.0 / jnp.sqrt(jnp.asarray(fan_in, jnp.float32))
    ks = jax.random.split(key, 6)
    uni = lambda k, shape: jax.random.uniform(
        k, shape, dtype=jnp.float32, minval=-bound, maxval=bound).astype(dtype)
    return {
        "wr": uni(ks[0], (3 * state_dim, state_dim)),
        "br": uni(ks[1], (1, state_dim)),
        "wz": uni(ks[2], (3 * state_dim, state_dim)),
        "bz": uni(ks[3], (1, state_dim)),
        "wt": uni(ks[4], (3 * state_dim, state_dim)),
        "bt": uni(ks[5], (1, state_dim)),
    }


def propagator_ref(state_cur, a_in, a_out, params):
    """Pure-JAX reference (mirrors the PyTorch forward, dropout in eval)."""
    a = jnp.concatenate([a_in, a_out, state_cur], axis=2)
    r = jax.nn.sigmoid(a @ params["wr"] + params["br"])
    z = jax.nn.sigmoid(a @ params["wz"] + params["bz"])
    joined = jnp.concatenate([a_in, a_out, r * state_cur], axis=2)
    h_hat = jnp.tanh(joined @ params["wt"] + params["bt"])
    return (1.0 - z) * state_cur + z * h_hat


if __name__ == "__main__":
    B, N, D = 2, 8, 32          # batch, nodes, state_dim
    dropout_rate = 0.1          # unused at inference (Dropout == identity)

    key = jax.random.PRNGKey(0)
    kp, ks, ki, ko = jax.random.split(key, 4)

    params = init_propagator_params(kp, D)
    packed = pack_propagator_params(params)     # one-time packing, not per call
    packed = jax.tree_util.tree_map(jax.block_until_ready, packed)

    state_cur = jax.random.normal(ks, (B, N, D), dtype=jnp.float32)
    a_in = jax.random.normal(ki, (B, N, D), dtype=jnp.float32)
    a_out = jax.random.normal(ko, (B, N, D), dtype=jnp.float32)

    out = propagator_forward(state_cur, a_in, a_out, packed)
    out = jax.block_until_ready(out)

    ref = propagator_ref(state_cur, a_in, a_out, params)
    assert out.shape == (B, N, D)
    assert jnp.allclose(out, ref, atol=1e-5, rtol=1e-5), "mismatch vs reference"

    print("KERNEL_OK")
</pallas_src>

<mosaic_0001>
module attributes {stable_mosaic.version = 11 : i64} {
  func.func @_propagator_kernel(%arg0: i32, %arg1: memref<8x32xf32, #tpu.memory_space<vmem>>, %arg2: memref<8x32xf32, #tpu.memory_space<vmem>>, %arg3: memref<8x32xf32, #tpu.memory_space<vmem>>, %arg4: memref<32x96xf32, #tpu.memory_space<vmem>>, %arg5: memref<32x96xf32, #tpu.memory_space<vmem>>, %arg6: memref<32x64xf32, #tpu.memory_space<vmem>>, %arg7: memref<32x32xf32, #tpu.memory_space<vmem>>, %arg8: memref<1x96xf32, #tpu.memory_space<vmem>>, %arg9: memref<8x32xf32, #tpu.memory_space<vmem>>) attributes {dimension_semantics = [#tpu.dimension_semantics<parallel>], iteration_bounds = array<i64: 2>, scalar_prefetch = 0 : i64, scratch_operands = 0 : i64, tpu.core_type = #tpu.core_type<tc>, window_params = [{transform_indices = @transform_0, window_bounds = array<i64: 8, 32>}, {transform_indices = @transform_1, window_bounds = array<i64: 8, 32>}, {transform_indices = @transform_2, window_bounds = array<i64: 8, 32>}, {pipeline_mode = #tpu.pipeline_mode<synchronous>, transform_indices = @transform_3, window_bounds = array<i64: 32, 96>}, {pipeline_mode = #tpu.pipeline_mode<synchronous>, transform_indices = @transform_4, window_bounds = array<i64: 32, 96>}, {pipeline_mode = #tpu.pipeline_mode<synchronous>, transform_indices = @transform_5, window_bounds = array<i64: 32, 64>}, {pipeline_mode = #tpu.pipeline_mode<synchronous>, transform_indices = @transform_6, window_bounds = array<i64: 32, 32>}, {pipeline_mode = #tpu.pipeline_mode<synchronous>, transform_indices = @transform_7, window_bounds = array<i64: 1, 96>}, {transform_indices = @transform_8, window_bounds = array<i64: 8, 32>}]} {
    %c0 = arith.constant 0 : index
    %c0_0 = arith.constant 0 : index
    %0 = vector.load %arg3[%c0, %c0_0] : memref<8x32xf32, #tpu.memory_space<vmem>>, vector<8x32xf32>
    %c0_1 = arith.constant 0 : index
    %c0_2 = arith.constant 0 : index
    %1 = vector.load %arg1[%c0_1, %c0_2] : memref<8x32xf32, #tpu.memory_space<vmem>>, vector<8x32xf32>
    %c0_3 = arith.constant 0 : index
    %c0_4 = arith.constant 0 : index
    %2 = vector.load %arg4[%c0_3, %c0_4] : memref<32x96xf32, #tpu.memory_space<vmem>>, vector<32x96xf32>
    %cst = arith.constant dense<0.000000e+00> : vector<8x96xf32>
    %3 = tpu.matmul %1, %2, %cst {dimension_numbers = #tpu.dot_dimension_numbers<[1], [0], [0], [1], [0, 0, 1, 1], [], []>} : vector<8x32xf32>, vector<32x96xf32>, vector<8x96xf32> -> vector<8x96xf32>
    %c0_5 = arith.constant 0 : index
    %c0_6 = arith.constant 0 : index
    %4 = vector.load %arg2[%c0_5, %c0_6] : memref<8x32xf32, #tpu.memory_space<vmem>>, vector<8x32xf32>
    %c0_7 = arith.constant 0 : index
    %c0_8 = arith.constant 0 : index
    %5 = vector.load %arg5[%c0_7, %c0_8] : memref<32x96xf32, #tpu.memory_space<vmem>>, vector<32x96xf32>
    %cst_9 = arith.constant dense<0.000000e+00> : vector<8x96xf32>
    %6 = tpu.matmul %4, %5, %cst_9 {dimension_numbers = #tpu.dot_dimension_numbers<[1], [0], [0], [1], [0, 0, 1, 1], [], []>} : vector<8x32xf32>, vector<32x96xf32>, vector<8x96xf32> -> vector<8x96xf32>
    %7 = arith.addf %3, %6 : vector<8x96xf32>
    %c0_10 = arith.constant 0 : index
    %c0_11 = arith.constant 0 : index
    %8 = vector.load %arg8[%c0_10, %c0_11] : memref<1x96xf32, #tpu.memory_space<vmem>>, vector<1x96xf32>
    %9 = vector.broadcast %8 : vector<1x96xf32> to vector<8x96xf32>
    %10 = arith.addf %7, %9 : vector<8x96xf32>
    %c0_12 = arith.constant 0 : index
    %c0_13 = arith.constant 0 : index
    %11 = vector.load %arg6[%c0_12, %c0_13] : memref<32x64xf32, #tpu.memory_space<vmem>>, vector<32x64xf32>
    %cst_14 = arith.constant dense<0.000000e+00> : vector<8x64xf32>
    %12 = tpu.matmul %0, %11, %cst_14 {dimension_numbers = #tpu.dot_dimension_numbers<[1], [0], [0], [1], [0, 0, 1, 1], [], []>} : vector<8x32xf32>, vector<32x64xf32>, vector<8x64xf32> -> vector<8x64xf32>
    %13 = vector.extract_strided_slice %10 {offsets = [0, 0], sizes = [8, 32], strides = [1, 1]} : vector<8x96xf32> to vector<8x32xf32>
    %14 = vector.extract_strided_slice %12 {offsets = [0, 0], sizes = [8, 32], strides = [1, 1]} : vector<8x64xf32> to vector<8x32xf32>
    %15 = arith.addf %13, %14 : vector<8x32xf32>
    %16 = arith.negf %15 : vector<8x32xf32>
    %17 = math.exp %16 : vector<8x32xf32>
    %cst_15 = arith.constant 1.000000e+00 : f32
    %18 = vector.broadcast %cst_15 : f32 to vector<8x32xf32>
    %19 = arith.addf %18, %17 : vector<8x32xf32>
    %20 = arith.divf %18, %19 : vector<8x32xf32>
    %21 = vector.extract_strided_slice %10 {offsets = [0, 32], sizes = [8, 32], strides = [1, 1]} : vector<8x96xf32> to vector<8x32xf32>
    %22 = vector.extract_strided_slice %12 {offsets = [0, 32], sizes = [8, 32], strides = [1, 1]} : vector<8x64xf32> to vector<8x32xf32>
    %23 = arith.addf %21, %22 : vector<8x32xf32>
    %24 = arith.negf %23 : vector<8x32xf32>
    %25 = math.exp %24 : vector<8x32xf32>
    %cst_16 = arith.constant 1.000000e+00 : f32
    %26 = vector.broadcast %cst_16 : f32 to vector<8x32xf32>
    %27 = arith.addf %26, %25 : vector<8x32xf32>
    %28 = arith.divf %26, %27 : vector<8x32xf32>
    %29 = arith.mulf %20, %0 : vector<8x32xf32>
    %30 = vector.extract_strided_slice %10 {offsets = [0, 64], sizes = [8, 32], strides = [1, 1]} : vector<8x96xf32> to vector<8x32xf32>
    %c0_17 = arith.constant 0 : index
    %c0_18 = arith.constant 0 : index
    %31 = vector.load %arg7[%c0_17, %c0_18] : memref<32x32xf32, #tpu.memory_space<vmem>>, vector<32x32xf32>
    %cst_19 = arith.constant dense<0.000000e+00> : vector<8x32xf32>
    %32 = tpu.matmul %29, %31, %cst_19 {dimension_numbers = #tpu.dot_dimension_numbers<[1], [0], [0], [1], [0, 0, 1, 1], [], []>} : vector<8x32xf32>, vector<32x32xf32>, vector<8x32xf32> -> vector<8x32xf32>
    %33 = arith.addf %30, %32 : vector<8x32xf32>
    %34 = math.tanh %33 : vector<8x32xf32>
    %35 = arith.subf %34, %0 : vector<8x32xf32>
    %36 = arith.mulf %28, %35 : vector<8x32xf32>
    %37 = arith.addf %0, %36 : vector<8x32xf32>
    %c0_20 = arith.constant 0 : index
    %c0_21 = arith.constant 0 : index
    %38 = vector.load %arg9[%c0_20, %c0_21] : memref<8x32xf32, #tpu.memory_space<vmem>>, vector<8x32xf32>
    tpu.vector_store %arg9[%c0_20, %c0_21], %37 {strides = array<i32>} : memref<8x32xf32, #tpu.memory_space<vmem>>, vector<8x32xf32>,
    return
  }
  func.func @transform_0(%arg0: i32) -> (i32, i32) {
    %c0_i32 = arith.constant 0 : i32
    %c0_i32_0 = arith.constant 0 : i32
    return %arg0, %c0_i32 : i32, i32
  }
  func.func @transform_1(%arg0: i32) -> (i32, i32) {
    %c0_i32 = arith.constant 0 : i32
    %c0_i32_0 = arith.constant 0 : i32
    return %arg0, %c0_i32 : i32, i32
  }
  func.func @transform_2(%arg0: i32) -> (i32, i32) {
    %c0_i32 = arith.constant 0 : i32
    %c0_i32_0 = arith.constant 0 : i32
    return %arg0, %c0_i32 : i32, i32
  }
  func.func @transform_3(%arg0: i32) -> (i32, i32) {
    %c0_i32 = arith.constant 0 : i32
    %c0_i32_0 = arith.constant 0 : i32
    %c0_i32_1 = arith.constant 0 : i32
    return %c0_i32, %c0_i32_0 : i32, i32
  }
  func.func @transform_4(%arg0: i32) -> (i32, i32) {
    %c0_i32 = arith.constant 0 : i32
    %c0_i32_0 = arith.constant 0 : i32
    %c0_i32_1 = arith.constant 0 : i32
    return %c0_i32, %c0_i32_0 : i32, i32
  }
  func.func @transform_5(%arg0: i32) -> (i32, i32) {
    %c0_i32 = arith.constant 0 : i32
    %c0_i32_0 = arith.constant 0 : i32
    %c0_i32_1 = arith.constant 0 : i32
    return %c0_i32, %c0_i32_0 : i32, i32
  }
  func.func @transform_6(%arg0: i32) -> (i32, i32) {
    %c0_i32 = arith.constant 0 : i32
    %c0_i32_0 = arith.constant 0 : i32
    %c0_i32_1 = arith.constant 0 : i32
    return %c0_i32, %c0_i32_0 : i32, i32
  }
  func.func @transform_7(%arg0: i32) -> (i32, i32) {
    %c0_i32 = arith.constant 0 : i32
    %c0_i32_0 = arith.constant 0 : i32
    %c0_i32_1 = arith.constant 0 : i32
    return %c0_i32, %c0_i32_0 : i32, i32
  }
  func.func @transform_8(%arg0: i32) -> (i32, i32) {
    %c0_i32 = arith.constant 0 : i32
    %c0_i32_0 = arith.constant 0 : i32
    return %arg0, %c0_i32 : i32, i32
  }
}

</mosaic_0001>

<llo_original>
// kernel: tpu_custom_call.1
$region0: #{tpu_custom_call.1}
  #allocation0 [shape = 'u32[]', space=smem, size = 0x4, offset = 0x4, fixed_abs, tag = 'smem constant byte address 0x4 - core index']
  #allocation1 [shape = 'u32[144,128]{1,0:T(1,128)}', space=vmem, size = 0x12000, scoped, tag = 'internal scratch']
  %s0 = inlined_call_operand.hbm [shape: f32[16,32], index: 0, kind: input, shape index: {}]
  %s1 = inlined_call_operand.hbm [shape: f32[16,32], index: 1, kind: input, shape index: {}]
  %s2 = inlined_call_operand.hbm [shape: f32[16,32], index: 2, kind: input, shape index: {}]
  %s3 = inlined_call_operand.hbm [shape: f32[32,96], index: 3, kind: input, shape index: {}]
  %s4 = inlined_call_operand.hbm [shape: f32[32,96], index: 4, kind: input, shape index: {}]
  %s5 = inlined_call_operand.hbm [shape: f32[32,64], index: 5, kind: input, shape index: {}]
  %s6 = inlined_call_operand.hbm [shape: f32[32,32], index: 6, kind: input, shape index: {}]
  %s7 = inlined_call_operand.vmem [shape: f32[1,96], index: 7, kind: input, shape index: {}]
  %s8 = inlined_call_operand.hbm [shape: f32[16,32], index: 8, kind: output, shape index: {}]
  %s9 = sld [smem:[#allocation0]]
  $region93: #{tpu_custom_call.1} parent=0
    _
  %s11 = ssub.s32 1, %s9
  %s12 = scalar_select 0, %s11, %s9
  $region1: #{tpu_custom_call.1} parent=0
    #allocation2 [shape = 'u8[8192]{0}', space=vmem, size = 0x2000, scoped, tag = 'input window, operand 0']
    #allocation3 [shape = 's32[2]{0}', space=sflag, size = 0x8, scoped, tag = 'scoped memory for tpu_custom_call.1']
    #allocation4 [shape = 's32[2]{0}', space=sflag, size = 0x8, scoped, tag = 'scoped memory for tpu_custom_call.1']
    #allocation5 [shape = 'u8[8192]{0}', space=vmem, size = 0x2000, scoped, tag = 'input window, operand 1']
    #allocation6 [shape = 's32[2]{0}', space=sflag, size = 0x8, scoped, tag = 'scoped memory for tpu_custom_call.1']
    #allocation7 [shape = 'u8[8192]{0}', space=vmem, size = 0x2000, scoped, tag = 'input window, operand 2']
    #allocation8 [shape = 'u8[16384]{0}', space=vmem, size = 0x4000, scoped, tag = 'input window, operand 3, single buffered']
    #allocation9 [shape = 's32[1]{0}', space=sflag, size = 0x4, scoped, tag = 'scoped memory for tpu_custom_call.1']
    #allocation10 [shape = 'u8[16384]{0}', space=vmem, size = 0x4000, scoped, tag = 'input window, operand 4, single buffered']
    #allocation11 [shape = 'u8[16384]{0}', space=vmem, size = 0x4000, scoped, tag = 'input window, operand 5, single buffered']
    #allocation12 [shape = 's32[1]{0}', space=sflag, size = 0x4, scoped, tag = 'scoped memory for tpu_custom_call.1']
    #allocation13 [shape = 'u8[16384]{0}', space=vmem, size = 0x4000, scoped, tag = 'input window, operand 6, single buffered']
    #allocation14 [shape = 'u8[8192]{0}', space=vmem, size = 0x2000, scoped, tag = 'output window, operand 0']
    %13 = vsyncpa [#allocation3], 0
    %s14 = scalar_lea.sflag [#allocation3], 1
    %15 = vsyncpa %s14, 0
    %16 = vsyncpa [#allocation6], 0
    %s17 = scalar_lea.sflag [#allocation6], 1
    %18 = vsyncpa %s17, 0
    %19 = vsyncpa [#allocation9], 0
    %20 = vsyncpa [#allocation12], 0
    %21 = vsyncpa [#allocation4], 0
    %s22 = scalar_lea.sflag [#allocation4], 1
    %23 = vsyncpa %s22, 0
    loop: start=0, step=1, limit=4
    $region2: #{tpu_custom_call.1} parent=1 // loop_pre_header
      _
    $region3: #{tpu_custom_call.1} parent=1 // loop_header
      %s25 = sphi 0, %s29
      %p26 = scmp.ge.s32.totalorder %s25, 4
      %s35 = sphi 0, %s37
      %s38 = sphi 0, %s35
      %s39 = sphi 0, %s38
      %s55 = sphi 0, %s39
      %s61 = sphi 0, %s63
      %s64 = sphi 0, %s61
      %s65 = sphi 0, %s64
      %s81 = sphi 0, %s65
      %s87 = sphi 0, %s89
      %s90 = sphi 0, %s87
      %s91 = sphi 0, %s90
      %s107 = sphi 0, %s91
      %s111 = sphi 0, %s111
      %s113 = sphi 0, %s111
      %s114 = sphi 0, %s113
      %s128 = sphi 0, %s114
      %s132 = sphi 0, %s132
      %s134 = sphi 0, %s132
      %s135 = sphi 0, %s134
      %s149 = sphi 0, %s135
      %s153 = sphi 0, %s153
      %s155 = sphi 0, %s153
      %s156 = sphi 0, %s155
      %s170 = sphi 0, %s156
      %s174 = sphi 0, %s174
      %s176 = sphi 0, %s174
      %s177 = sphi 0, %s176
      %s191 = sphi 0, %s177
      %s195 = sphi 0, %s195
      %s197 = sphi 0, %s195
      %s198 = sphi 0, %s197
      %s212 = sphi 0, %s198
      %s218 = sphi 0, %s220
      %s221 = sphi 0, %s218
      %s222 = sphi 0, %s221
      %s238 = sphi 0, %s222
    $region4: #{tpu_custom_call.1} parent=1 // loop_header_branch
      %28 = sbr.rel (%p26) target = $region8
    $region5: #{tpu_custom_call.1} parent=1 // loop_body
      %s30 = ssub.s32 %s25, 1
      %s31 = ssub.s32 %s25, 2
      %s32 = sadd.s32 %s25, 1
      %s33 = ssub.s32 %s25, %s32
      %p34 = scmp.eq.s32.totalorder %s33, 0
      %s36 = sadd.s32 %s35, 1
      %s37 = scalar_select %p34, %s35, %s36
      %p40 = pneg %p34
      %p41 = scmp.eq.s32.totalorder %s25, 1
      %p42 = por %p40, %p41
      %p43 = scmp.ne.s32.totalorder %s35, %s38
      %p44 = scmp.eq.s32.totalorder %s25, 0
      %p45 = por %p43, %p44
      %p46 = scmp.ne.s32.totalorder %s35, %s38
      %p47 = scmp.eq.s32.totalorder %s30, 1
      %p48 = por %p46, %p47
      %p49 = scmp.ne.s32.totalorder %s38, %s39
      %p50 = scmp.eq.s32.totalorder %s30, 0
      %p51 = por %p49, %p50
      %p52 = scmp.ne.s32.totalorder %s38, %s39
      %p53 = scmp.eq.s32.totalorder %s31, 1
      %p54 = por %p52, %p53
      %p56 = scmp.ne.s32.totalorder %s39, %s55
      %p57 = scmp.eq.s32.totalorder %s31, 0
      %p58 = por %p56, %p57
      %s59 = ssub.s32 %s25, %s32
      %p60 = scmp.eq.s32.totalorder %s59, 0
      %s62 = sadd.s32 %s61, 1
      %s63 = scalar_select %p60, %s61, %s62
      %p66 = pneg %p60
      %p67 = scmp.eq.s32.totalorder %s25, 1
      %p68 = por %p66, %p67
      %p69 = scmp.ne.s32.totalorder %s61, %s64
      %p70 = scmp.eq.s32.totalorder %s25, 0
      %p71 = por %p69, %p70
      %p72 = scmp.ne.s32.totalorder %s61, %s64
      %p73 = scmp.eq.s32.totalorder %s30, 1
      %p74 = por %p72, %p73
      %p75 = scmp.ne.s32.totalorder %s64, %s65
      %p76 = scmp.eq.s32.totalorder %s30, 0
      %p77 = por %p75, %p76
      %p78 = scmp.ne.s32.totalorder %s64, %s65
      %p79 = scmp.eq.s32.totalorder %s31, 1
      %p80 = por %p78, %p79
      %p82 = scmp.ne.s32.totalorder %s65, %s81
      %p83 = scmp.eq.s32.totalorder %s31, 0
      %p84 = por %p82, %p83
      %s85 = ssub.s32 %s25, %s32
      %p86 = scmp.eq.s32.totalorder %s85, 0
      %s88 = sadd.s32 %s87, 1
      %s89 = scalar_select %p86, %s87, %s88
      %p92 = pneg %p86
      %p93 = scmp.eq.s32.totalorder %s25, 1
      %p94 = por %p92, %p93
      %p95 = scmp.ne.s32.totalorder %s87, %s90
      %p96 = scmp.eq.s32.totalorder %s25, 0
      %p97 = por %p95, %p96
      %p98 = scmp.ne.s32.totalorder %s87, %s90
      %p99 = scmp.eq.s32.totalorder %s30, 1
      %p100 = por %p98, %p99
      %p101 = scmp.ne.s32.totalorder %s90, %s91
      %p102 = scmp.eq.s32.totalorder %s30, 0
      %p103 = por %p101, %p102
      %p104 = scmp.ne.s32.totalorder %s90, %s91
      %p105 = scmp.eq.s32.totalorder %s31, 1
      %p106 = por %p104, %p105
      %p108 = scmp.ne.s32.totalorder %s91, %s107
      %p109 = scmp.eq.s32.totalorder %s31, 0
      %p110 = por %p108, %p109
      %s112 = sadd.s32 %s111, 1
      %p115 = scmp.eq.s32.totalorder %s25, 1
      %p116 = scmp.ne.s32.totalorder %s111, %s113
      %p117 = scmp.eq.s32.totalorder %s25, 0
      %p118 = por %p116, %p117
      %p119 = scmp.ne.s32.totalorder %s111, %s113
      %p120 = scmp.eq.s32.totalorder %s30, 1
      %p121 = por %p119, %p120
      %p122 = scmp.ne.s32.totalorder %s113, %s114
      %p123 = scmp.eq.s32.totalorder %s30, 0
      %p124 = por %p122, %p123
      %p125 = scmp.ne.s32.totalorder %s113, %s114
      %p126 = scmp.eq.s32.totalorder %s31, 1
      %p127 = por %p125, %p126
      %p129 = scmp.ne.s32.totalorder %s114, %s128
      %p130 = scmp.eq.s32.totalorder %s31, 0
      %p131 = por %p129, %p130
      %s133 = sadd.s32 %s132, 1
      %p136 = scmp.eq.s32.totalorder %s25, 1
      %p137 = scmp.ne.s32.totalorder %s132, %s134
      %p138 = scmp.eq.s32.totalorder %s25, 0
      %p139 = por %p137, %p138
      %p140 = scmp.ne.s32.totalorder %s132, %s134
      %p141 = scmp.eq.s32.totalorder %s30, 1
      %p142 = por %p140, %p141
      %p143 = scmp.ne.s32.totalorder %s134, %s135
      %p144 = scmp.eq.s32.totalorder %s30, 0
      %p145 = por %p143, %p144
      %p146 = scmp.ne.s32.totalorder %s134, %s135
      %p147 = scmp.eq.s32.totalorder %s31, 1
      %p148 = por %p146, %p147
      %p150 = scmp.ne.s32.totalorder %s135, %s149
      %p151 = scmp.eq.s32.totalorder %s31, 0
      %p152 = por %p150, %p151
      %s154 = sadd.s32 %s153, 1
      %p157 = scmp.eq.s32.totalorder %s25, 1
      %p158 = scmp.ne.s32.totalorder %s153, %s155
      %p159 = scmp.eq.s32.totalorder %s25, 0
      %p160 = por %p158, %p159
      %p161 = scmp.ne.s32.totalorder %s153, %s155
      %p162 = scmp.eq.s32.totalorder %s30, 1
      %p163 = por %p161, %p162
      %p164 = scmp.ne.s32.totalorder %s155, %s156
      %p165 = scmp.eq.s32.totalorder %s30, 0
      %p166 = por %p164, %p165
      %p167 = scmp.ne.s32.totalorder %s155, %s156
      %p168 = scmp.eq.s32.totalorder %s31, 1
      %p169 = por %p167, %p168
      %p171 = scmp.ne.s32.totalorder %s156, %s170
      %p172 = scmp.eq.s32.totalorder %s31, 0
      %p173 = por %p171, %p172
      %s175 = sadd.s32 %s174, 1
      %p178 = scmp.eq.s32.totalorder %s25, 1
      %p179 = scmp.ne.s32.totalorder %s174, %s176
      %p180 = scmp.eq.s32.totalorder %s25, 0
      %p181 = por %p179, %p180
      %p182 = scmp.ne.s32.totalorder %s174, %s176
      %p183 = scmp.eq.s32.totalorder %s30, 1
      %p184 = por %p182, %p183
      %p185 = scmp.ne.s32.totalorder %s176, %s177
      %p186 = scmp.eq.s32.totalorder %s30, 0
      %p187 = por %p185, %p186
      %p188 = scmp.ne.s32.totalorder %s176, %s177
      %p189 = scmp.eq.s32.totalorder %s31, 1
      %p190 = por %p188, %p189
      %p192 = scmp.ne.s32.totalorder %s177, %s191
      %p193 = scmp.eq.s32.totalorder %s31, 0
      %p194 = por %p192, %p193
      %s196 = sadd.s32 %s195, 1
      %p199 = scmp.eq.s32.totalorder %s25, 1
      %p200 = scmp.ne.s32.totalorder %s195, %s197
      %p201 = scmp.eq.s32.totalorder %s25, 0
      %p202 = por %p200, %p201
      %p203 = scmp.ne.s32.totalorder %s195, %s197
      %p204 = scmp.eq.s32.totalorder %s30, 1
      %p205 = por %p203, %p204
      %p206 = scmp.ne.s32.totalorder %s197, %s198
      %p207 = scmp.eq.s32.totalorder %s30, 0
      %p208 = por %p206, %p207
      %p209 = scmp.ne.s32.totalorder %s197, %s198
      %p210 = scmp.eq.s32.totalorder %s31, 1
      %p211 = por %p209, %p210
      %p213 = scmp.ne.s32.totalorder %s198, %s212
      %p214 = scmp.eq.s32.totalorder %s31, 0
      %p215 = por %p213, %p214
      %s216 = ssub.s32 %s25, %s32
      %p217 = scmp.eq.s32.totalorder %s216, 0
      %s219 = sadd.s32 %s218, 1
      %s220 = scalar_select %p217, %s218, %s219
      %p223 = pneg %p217
      %p224 = scmp.eq.s32.totalorder %s25, 1
      %p225 = por %p223, %p224
      %p226 = scmp.ne.s32.totalorder %s218, %s221
      %p227 = scmp.eq.s32.totalorder %s25, 0
      %p228 = por %p226, %p227
      %p229 = scmp.ne.s32.totalorder %s218, %s221
      %p230 = scmp.eq.s32.totalorder %s30, 1
      %p231 = por %p229, %p230
      %p232 = scmp.ne.s32.totalorder %s221, %s222
      %p233 = scmp.eq.s32.totalorder %s30, 0
      %p234 = por %p232, %p233
      %p235 = scmp.ne.s32.totalorder %s221, %s222
      %p236 = scmp.eq.s32.totalorder %s31, 1
      %p237 = por %p235, %p236
      %p239 = scmp.ne.s32.totalorder %s222, %s238
      %p240 = scmp.eq.s32.totalorder %s31, 0
      %p241 = por %p239, %p240
      %p242 = scmp.le.s32.totalorder 1, %s25
      %p243 = scmp.lt.s32.totalorder %s25, 3
      %p244 = pnand %p242, %p243
      %p245 = pneg %p244
      // Predicated region
      $region9: #{tpu_custom_call.1} parent=5 // pred_check
        _
      $region10: #{tpu_custom_call.1} parent=5 // pred_check_branch
        %247 = sbr.rel (%p244) target = $region12
      $region11: #{tpu_custom_call.1} parent=5 // pred_region
        %s248 = ssub.s32 %s25, 1
        // Predicated region
        $region13: #{tpu_custom_call.1} parent=11 // pred_check
          %p249 = pneg %p124
        $region14: #{tpu_custom_call.1} parent=11 // pred_check_branch
          %251 = sbr.rel (%p249) target = $region16
        $region15: #{tpu_custom_call.1} parent=11 // pred_region
          %s253 = ssub.s32 512, 512
          %254 = vsyncadd [#allocation9], %s253
          %s255 = sshll.u32 [#allocation8], 4
          %s256 = int_to_ptr.vmem [resolvable:$true] %s255
          %261 = dma.hbm_to_vmem [thread:$0]  %s3, 512, %s256, [#allocation9], 128, 128, 8
        $region16: #{tpu_custom_call.1} parent=11 // pred_fallthru
          _
        // Predicated region
        $region17: #{tpu_custom_call.1} parent=11 // pred_check
          %p262 = pneg %p145
        $region18: #{tpu_custom_call.1} parent=11 // pred_check_branch
          %264 = sbr.rel (%p262) target = $region20
        $region19: #{tpu_custom_call.1} parent=11 // pred_region
          %s266 = ssub.s32 512, 512
          %267 = vsyncadd [#allocation9], %s266
          %s268 = sshll.u32 [#allocation10], 4
          %s269 = int_to_ptr.vmem [resolvable:$true] %s268
          %274 = dma.hbm_to_vmem [thread:$0]  %s4, 512, %s269, [#allocation9], 128, 128, 8
        $region20: #{tpu_custom_call.1} parent=11 // pred_fallthru
          _
        // Predicated region
        $region21: #{tpu_custom_call.1} parent=11 // pred_check
          %p275 = pneg %p166
        $region22: #{tpu_custom_call.1} parent=11 // pred_check_branch
          %277 = sbr.rel (%p275) target = $region24
        $region23: #{tpu_custom_call.1} parent=11 // pred_region
          %s279 = ssub.s32 512, 512
          %280 = vsyncadd [#allocation12], %s279
          %s281 = sshll.u32 [#allocation11], 4
          %s282 = int_to_ptr.vmem [resolvable:$true] %s281
          %287 = dma.hbm_to_vmem [thread:$0]  %s5, 512, %s282, [#allocation12], 128, 128, 8
        $region24: #{tpu_custom_call.1} parent=11 // pred_fallthru
          _
        // Predicated region
        $region25: #{tpu_custom_call.1} parent=11 // pred_check
          %p288 = pneg %p187
        $region26: #{tpu_custom_call.1} parent=11 // pred_check_branch
          %290 = sbr.rel (%p288) target = $region28
        $region27: #{tpu_custom_call.1} parent=11 // pred_region
          %s292 = ssub.s32 512, 512
          %293 = vsyncadd [#allocation12], %s292
          %s294 = sshll.u32 [#allocation13], 4
          %s295 = int_to_ptr.vmem [resolvable:$true] %s294
          %300 = dma.hbm_to_vmem [thread:$0]  %s6, 512, %s295, [#allocation12], 128, 128, 8
        $region28: #{tpu_custom_call.1} parent=11 // pred_fallthru
          _
        // Predicated region
        $region29: #{tpu_custom_call.1} parent=11 // pred_check
          %p301 = pneg %p208
        $region30: #{tpu_custom_call.1} parent=11 // pred_check_branch
          %303 = sbr.rel (%p301) target = $region32
        $region31: #{tpu_custom_call.1} parent=11 // pred_region
          _
        $region32: #{tpu_custom_call.1} parent=11 // pred_fallthru
          _
      $region12: #{tpu_custom_call.1} parent=5 // pred_fallthru
        _
      %p304 = scmp.lt.s32.totalorder %s25, 2
      // Predicated region
      $region33: #{tpu_custom_call.1} parent=5 // pred_check
        %p305 = pneg %p304
      $region34: #{tpu_custom_call.1} parent=5 // pred_check_branch
        %307 = sbr.rel (%p305) target = $region36
      $region35: #{tpu_custom_call.1} parent=5 // pred_region
        // Predicated region
        $region37: #{tpu_custom_call.1} parent=35 // pred_check
          %p308 = pneg %p45
        $region38: #{tpu_custom_call.1} parent=35 // pred_check_branch
          %310 = sbr.rel (%p308) target = $region40
        $region39: #{tpu_custom_call.1} parent=35 // pred_region
          %s311 = sand.u32 %s35, 1
          %s312 = scalar_lea.sflag [#allocation3], %s311
          %s313 = sand.u32 %s35, 1
          %s314 = smul.addr %s313, 8
          %s315 = scalar_lea.vmem [#allocation2], %s314
          %s317 = ssub.s32 128, 128
          %318 = vsyncadd %s312, %s317
          %s319 = smul.addr %s25, 128
          %s320 = scalar_lea.hbm %s0, %s319
          %s322 = sshll.u32 %s315, 4
          %s323 = int_to_ptr.vmem [resolvable:$true] %s322
          %325 = dma.hbm_to_vmem [thread:$0]  %s320, 128, %s323, %s312
        $region40: #{tpu_custom_call.1} parent=35 // pred_fallthru
          _
        // Predicated region
        $region41: #{tpu_custom_call.1} parent=35 // pred_check
          %p326 = pneg %p71
        $region42: #{tpu_custom_call.1} parent=35 // pred_check_branch
          %328 = sbr.rel (%p326) target = $region44
        $region43: #{tpu_custom_call.1} parent=35 // pred_region
          %s329 = sand.u32 %s25, 1
          %s330 = scalar_lea.sflag [#allocation6], %s329
          %s331 = sand.u32 %s61, 1
          %s332 = smul.addr %s331, 8
          %s333 = scalar_lea.vmem [#allocation5], %s332
          %s335 = ssub.s32 128, 128
          %336 = vsyncadd %s330, %s335
          %s337 = smul.addr %s25, 128
          %s338 = scalar_lea.hbm %s1, %s337
          %s340 = sshll.u32 %s333, 4
          %s341 = int_to_ptr.vmem [resolvable:$true] %s340
          %343 = dma.hbm_to_vmem [thread:$0]  %s338, 128, %s341, %s330
        $region44: #{tpu_custom_call.1} parent=35 // pred_fallthru
          _
        // Predicated region
        $region45: #{tpu_custom_call.1} parent=35 // pred_check
          %p344 = pneg %p97
        $region46: #{tpu_custom_call.1} parent=35 // pred_check_branch
          %346 = sbr.rel (%p344) target = $region48
        $region47: #{tpu_custom_call.1} parent=35 // pred_region
          %s347 = sand.u32 %s25, 1
          %s348 = scalar_lea.sflag [#allocation6], %s347
          %s349 = sand.u32 %s87, 1
          %s350 = smul.addr %s349, 8
          %s351 = scalar_lea.vmem [#allocation7], %s350
          %s353 = ssub.s32 128, 128
          %354 = vsyncadd %s348, %s353
          %s355 = smul.addr %s25, 128
          %s356 = scalar_lea.hbm %s2, %s355
          %s358 = sshll.u32 %s351, 4
          %s359 = int_to_ptr.vmem [resolvable:$true] %s358
          %361 = dma.hbm_to_vmem [thread:$0]  %s356, 128, %s359, %s348
        $region48: #{tpu_custom_call.1} parent=35 // pred_fallthru
          _
      $region36: #{tpu_custom_call.1} parent=5 // pred_fallthru
        _
      %p362 = scmp.le.s32.totalorder 1, %s25
      %p363 = scmp.lt.s32.totalorder %s25, 3
      %p364 = pnand %p362, %p363
      %p365 = pneg %p364
      // Predicated region
      $region49: #{tpu_custom_call.1} parent=5 // pred_check
        _
      $region50: #{tpu_custom_call.1} parent=5 // pred_check_branch
        %367 = sbr.rel (%p364) target = $region52
      $region51: #{tpu_custom_call.1} parent=5 // pred_region
        %s368 = ssub.s32 %s25, 1
        %s369 = sand.u32 %s38, 1
        %s370 = scalar_lea.sflag [#allocation3], %s369
        %s371 = sand.u32 %s38, 1
        %s372 = smul.addr %s371, 8
        %s373 = scalar_lea.vmem [#allocation2], %s372
        // Predicated region
        $region53: #{tpu_custom_call.1} parent=51 // pred_check
          %p374 = pneg %p51
        $region54: #{tpu_custom_call.1} parent=51 // pred_check_branch
          %376 = sbr.rel (%p374) target = $region56
        $region55: #{tpu_custom_call.1} parent=51 // pred_region
          %377 = dma.done %s370, 128
        $region56: #{tpu_custom_call.1} parent=51 // pred_fallthru
          _
        %s378 = sand.u32 %s30, 1
        %s379 = scalar_lea.sflag [#allocation6], %s378
        %s380 = sand.u32 %s64, 1
        %s381 = smul.addr %s380, 8
        %s382 = scalar_lea.vmem [#allocation5], %s381
        // Predicated region
        $region57: #{tpu_custom_call.1} parent=51 // pred_check
          %p383 = pneg %p77
        $region58: #{tpu_custom_call.1} parent=51 // pred_check_branch
          %385 = sbr.rel (%p383) target = $region60
        $region59: #{tpu_custom_call.1} parent=51 // pred_region
          %386 = dma.done %s379, 128
        $region60: #{tpu_custom_call.1} parent=51 // pred_fallthru
          _
        %s387 = sand.u32 %s30, 1
        %s388 = scalar_lea.sflag [#allocation6], %s387
        %s389 = sand.u32 %s90, 1
        %s390 = smul.addr %s389, 8
        %s391 = scalar_lea.vmem [#allocation7], %s390
        // Predicated region
        $region61: #{tpu_custom_call.1} parent=51 // pred_check
          %p392 = pneg %p103
        $region62: #{tpu_custom_call.1} parent=51 // pred_check_branch
          %394 = sbr.rel (%p392) target = $region64
        $region63: #{tpu_custom_call.1} parent=51 // pred_region
          %395 = dma.done %s388, 128
        $region64: #{tpu_custom_call.1} parent=51 // pred_fallthru
          _
        // Predicated region
        $region65: #{tpu_custom_call.1} parent=51 // pred_check
          %p396 = pneg %p124
        $region66: #{tpu_custom_call.1} parent=51 // pred_check_branch
          %398 = sbr.rel (%p396) target = $region68
        $region67: #{tpu_custom_call.1} parent=51 // pred_region
          %399 = dma.done [#allocation9], 512
        $region68: #{tpu_custom_call.1} parent=51 // pred_fallthru
          _
        // Predicated region
        $region69: #{tpu_custom_call.1} parent=51 // pred_check
          %p400 = pneg %p145
        $region70: #{tpu_custom_call.1} parent=51 // pred_check_branch
          %402 = sbr.rel (%p400) target = $region72
        $region71: #{tpu_custom_call.1} parent=51 // pred_region
          %403 = dma.done [#allocation9], 512
        $region72: #{tpu_custom_call.1} parent=51 // pred_fallthru
          _
        // Predicated region
        $region73: #{tpu_custom_call.1} parent=51 // pred_check
          %p404 = pneg %p166
        $region74: #{tpu_custom_call.1} parent=51 // pred_check_branch
          %406 = sbr.rel (%p404) target = $region76
        $region75: #{tpu_custom_call.1} parent=51 // pred_region
          %407 = dma.done [#allocation12], 512
        $region76: #{tpu_custom_call.1} parent=51 // pred_fallthru
          _
        // Predicated region
        $region77: #{tpu_custom_call.1} parent=51 // pred_check
          %p408 = pneg %p187
        $region78: #{tpu_custom_call.1} parent=51 // pred_check_branch
          %410 = sbr.rel (%p408) target = $region80
        $region79: #{tpu_custom_call.1} parent=51 // pred_region
          %411 = dma.done [#allocation12], 512
        $region80: #{tpu_custom_call.1} parent=51 // pred_fallthru
          _
        %s412 = sand.u32 %s38, 1
        %s413 = scalar_lea.sflag [#allocation3], %s412
        %s414 = sand.u32 %s38, 1
        %s415 = smul.addr %s414, 8
        %s416 = scalar_lea.vmem [#allocation2], %s415
        %p417 = pneg %p51
        %p418 = pneg %p48
        %s419 = sand.u32 %s30, 1
        %s420 = scalar_lea.sflag [#allocation6], %s419
        %s421 = sand.u32 %s64, 1
        %s422 = smul.addr %s421, 8
        %s423 = scalar_lea.vmem [#allocation5], %s422
        %p424 = pneg %p77
        %p425 = pneg %p74
        %s426 = sand.u32 %s30, 1
        %s427 = scalar_lea.sflag [#allocation6], %s426
        %s428 = sand.u32 %s90, 1
        %s429 = smul.addr %s428, 8
        %s430 = scalar_lea.vmem [#allocation7], %s429
        %p431 = pneg %p103
        %p432 = pneg %p100
        %p433 = pneg %p124
        %p434 = pneg %p121
        %p435 = pneg %p145
        %p436 = pneg %p142
        %p437 = pneg %p166
        %p438 = pneg %p163
        %p439 = pneg %p187
        %p440 = pneg %p184
        %p441 = pneg %p208
        %p442 = pneg %p205
        %p443 = pneg %p234
        %p444 = pneg %p231
        %s445 = sand.u32 %s221, 1
        %s446 = scalar_lea.sflag [#allocation4], %s445
        %s447 = sand.u32 %s221, 1
        %s448 = smul.addr %s447, 8
        %s449 = scalar_lea.vmem [#allocation14], %s448
        %v450 = vld [vmem:[%s391] sm:$0xff]
        %v451 = vld [vmem:[%s373] sm:$0xff]
        %v452 = vld [vmem:[#allocation8] sm:$0xff]
        %v453 = vld [vmem:[#allocation8 + $0x8] sm:$0xff]
        %v454 = vld [vmem:[#allocation8 + $0x10] sm:$0xff]
        %v455 = vld [vmem:[#allocation8 + $0x18] sm:$0xff]
        %v456 = vld [vmem:[%s382] sm:$0xff]
        %v457 = vld [vmem:[#allocation10] sm:$0xff]
        %v458 = vld [vmem:[#allocation10 + $0x8] sm:$0xff]
        %v459 = vld [vmem:[#allocation10 + $0x10] sm:$0xff]
        %v460 = vld [vmem:[#allocation10 + $0x18] sm:$0xff]
        %vm461 = vcmask 261120
        %v463 = vsel %vm461, %v456, 0
        %465 = vmatprep.subr.mxu0 0.0
        %466 = vmatpush1.msra.mxu0 %v457
        %467 = vmatprep.subr.mxu0 0.0
        %468 = vmatpush1.msra.mxu0 %v458
        %469 = vmatprep.subr.mxu0 0.0
        %470 = vmatpush1.msra.mxu0 %v459
        %471 = vmatprep.subr.mxu0 0.0
        %472 = vmatpush1.msra.mxu0 %v460
        %473 = vmatprep.subr.mxu0 0.0
        %474 = vmatpush1.msra.mxu0 0.0
        %475 = vmatprep.subr.mxu0 0.0
        %476 = vmatpush1.msra.mxu0 0.0
        %477 = vmatprep.subr.mxu0 0.0
        %478 = vmatpush1.msra.mxu0 0.0
        %479 = vmatprep.subr.mxu0 0.0
        %480 = vmatpush1.msra.mxu0 0.0
        %481 = vmatprep.subr.mxu0 0.0
        %482 = vmatpush1.msra.mxu0 0.0
        %483 = vmatprep.subr.mxu0 0.0
        %484 = vmatpush1.msra.mxu0 0.0
        %485 = vmatprep.subr.mxu0 0.0
        %486 = vmatpush1.msra.mxu0 0.0
        %487 = vmatprep.subr.mxu0 0.0
        %488 = vmatpush1.msra.mxu0 0.0
        %489 = vmatprep.subr.mxu0 0.0
        %490 = vmatpush1.msra.mxu0 0.0
        %491 = vmatprep.subr.mxu0 0.0
        %492 = vmatpush1.msra.mxu0 0.0
        %493 = vmatprep.subr.mxu0 0.0
        %494 = vmatpush1.msra.mxu0 0.0
        %495 = vmatprep.subr.mxu0 0.0
        %496 = vmatpush1.msra.mxu0 0.0
        %497 = vmatprep.subr.mxu0 0.0
        %498 = vmatpush1.msra.mxu0 0.0
        %499 = vmatprep.subr.mxu0 0.0
        %500 = vmatpush1.msra.mxu0 0.0
        %501 = vmatprep.subr.mxu0 0.0
        %502 = vmatpush1.msra.mxu0 0.0
        %503 = vmatprep.subr.mxu0 0.0
        %504 = vmatpush1.msra.mxu0 0.0
        %505 = vmatprep.subr.mxu0 0.0
        %506 = vmatpush1.msra.mxu0 0.0
        %507 = vmatprep.subr.mxu0 0.0
        %508 = vmatpush1.msra.mxu0 0.0
        %509 = vmatprep.subr.mxu0 0.0
        %510 = vmatpush1.msra.mxu0 0.0
        %511 = vmatprep.subr.mxu0 0.0
        %512 = vmatpush1.msra.mxu0 0.0
        %513 = vmatprep.subr.mxu0 0.0
        %514 = vmatpush1.msra.mxu0 0.0
        %515 = vmatprep.subr.mxu0 0.0
        %516 = vmatpush1.msra.mxu0 0.0
        %517 = vmatprep.subr.mxu0 0.0
        %518 = vmatpush1.msra.mxu0 0.0
        %519 = vmatprep.subr.mxu0 0.0
        %520 = vmatpush1.msra.mxu0 0.0
        %521 = vmatprep.subr.mxu0 0.0
        %522 = vmatpush1.msra.mxu0 0.0
        %523 = vmatprep.subr.mxu0 0.0
        %524 = vmatpush1.msra.mxu0 0.0
        %525 = vmatprep.subr.mxu0 0.0
        %526 = vmatpush1.msra.mxu0 0.0
        %527 = vmatprep.subr.mxu0 0.0
        %528 = vmatpush1.msra.mxu0 0.0
        %529 = vmatprep.mubr.f32.mxu0 0.0
        %530 = vmatmul.mubr.f32.gmra.mrb[0].mxu0 %v463
        %v531 = vpop.f32.mrb[0].mxu0
        %v532 = vadd.f32 0.0, %v531
        %v533 = vpop.f32.mrb[0].mxu0
        %534 = vdwg.mxu0
        %v536 = vsel %vm461, %v451, 0
        %538 = vmatprep.subr.mxu0 0.0
        %539 = vmatpush1.msra.mxu0 %v452
        %540 = vmatprep.subr.mxu0 0.0
        %541 = vmatpush1.msra.mxu0 %v453
        %542 = vmatprep.subr.mxu0 0.0
        %543 = vmatpush1.msra.mxu0 %v454
        %544 = vmatprep.subr.mxu0 0.0
        %545 = vmatpush1.msra.mxu0 %v455
        %546 = vmatprep.subr.mxu0 0.0
        %547 = vmatpush1.msra.mxu0 0.0
        %548 = vmatprep.subr.mxu0 0.0
        %549 = vmatpush1.msra.mxu0 0.0
        %550 = vmatprep.subr.mxu0 0.0
        %551 = vmatpush1.msra.mxu0 0.0
        %552 = vmatprep.subr.mxu0 0.0
        %553 = vmatpush1.msra.mxu0 0.0
        %554 = vmatprep.subr.mxu0 0.0
        %555 = vmatpush1.msra.mxu0 0.0
        %556 = vmatprep.subr.mxu0 0.0
        %557 = vmatpush1.msra.mxu0 0.0
        %558 = vmatprep.subr.mxu0 0.0
        %559 = vmatpush1.msra.mxu0 0.0
        %560 = vmatprep.subr.mxu0 0.0
        %561 = vmatpush1.msra.mxu0 0.0
        %562 = vmatprep.subr.mxu0 0.0
        %563 = vmatpush1.msra.mxu0 0.0
        %564 = vmatprep.subr.mxu0 0.0
        %565 = vmatpush1.msra.mxu0 0.0
        %566 = vmatprep.subr.mxu0 0.0
        %567 = vmatpush1.msra.mxu0 0.0
        %568 = vmatprep.subr.mxu0 0.0
        %569 = vmatpush1.msra.mxu0 0.0
        %570 = vmatprep.subr.mxu0 0.0
        %571 = vmatpush1.msra.mxu0 0.0
        %572 = vmatprep.subr.mxu0 0.0
        %573 = vmatpush1.msra.mxu0 0.0
        %574 = vmatprep.subr.mxu0 0.0
        %575 = vmatpush1.msra.mxu0 0.0
        %576 = vmatprep.subr.mxu0 0.0
        %577 = vmatpush1.msra.mxu0 0.0
        %578 = vmatprep.subr.mxu0 0.0
        %579 = vmatpush1.msra.mxu0 0.0
        %580 = vmatprep.subr.mxu0 0.0
        %581 = vmatpush1.msra.mxu0 0.0
        %582 = vmatprep.subr.mxu0 0.0
        %583 = vmatpush1.msra.mxu0 0.0
        %584 = vmatprep.subr.mxu0 0.0
        %585 = vmatpush1.msra.mxu0 0.0
        %586 = vmatprep.subr.mxu0 0.0
        %587 = vmatpush1.msra.mxu0 0.0
        %588 = vmatprep.subr.mxu0 0.0
        %589 = vmatpush1.msra.mxu0 0.0
        %590 = vmatprep.subr.mxu0 0.0
        %591 = vmatpush1.msra.mxu0 0.0
        %592 = vmatprep.subr.mxu0 0.0
        %593 = vmatpush1.msra.mxu0 0.0
        %594 = vmatprep.subr.mxu0 0.0
        %595 = vmatpush1.msra.mxu0 0.0
        %596 = vmatprep.subr.mxu0 0.0
        %597 = vmatpush1.msra.mxu0 0.0
        %598 = vmatprep.subr.mxu0 0.0
        %599 = vmatpush1.msra.mxu0 0.0
        %600 = vmatprep.subr.mxu0 0.0
        %601 = vmatpush1.msra.mxu0 0.0
        %602 = vmatprep.mubr.f32.mxu0 0.0
        %603 = vmatmul.mubr.f32.gmra.mrb[0].mxu0 %v536
        %v604 = vpop.f32.mrb[0].mxu0
        %v605 = vadd.f32 %v532, %v604
        %v606 = vpop.f32.mrb[0].mxu0
        %607 = vdwg.mxu0
        %v608 = vld [vmem:[%s7] sm:$0x1]
        %v610 = vlaneseq
        %v611 = vshrl.u32 %v610, 7
        %v612 = vsub.s32 0, %v611
        %v613 = vrot.slane %v608, %v612
        %v615 = vadd.f32 %v605, %v613
        %v616 = vld [vmem:[#allocation11] sm:$0xff]
        %v617 = vld [vmem:[#allocation11 + $0x8] sm:$0xff]
        %v618 = vld [vmem:[#allocation11 + $0x10] sm:$0xff]
        %v619 = vld [vmem:[#allocation11 + $0x18] sm:$0xff]
        %v621 = vsel %vm461, %v450, 0
        %623 = vmatprep.subr.mxu0 0.0
        %624 = vmatpush1.msra.mxu0 %v616
        %625 = vmatprep.subr.mxu0 0.0
        %626 = vmatpush1.msra.mxu0 %v617
        %627 = vmatprep.subr.mxu0 0.0
        %628 = vmatpush1.msra.mxu0 %v618
        %629 = vmatprep.subr.mxu0 0.0
        %630 = vmatpush1.msra.mxu0 %v619
        %631 = vmatprep.subr.mxu0 0.0
        %632 = vmatpush1.msra.mxu0 0.0
        %633 = vmatprep.subr.mxu0 0.0
        %634 = vmatpush1.msra.mxu0 0.0
        %635 = vmatprep.subr.mxu0 0.0
        %636 = vmatpush1.msra.mxu0 0.0
        %637 = vmatprep.subr.mxu0 0.0
        %638 = vmatpush1.msra.mxu0 0.0
        %639 = vmatprep.subr.mxu0 0.0
        %640 = vmatpush1.msra.mxu0 0.0
        %641 = vmatprep.subr.mxu0 0.0
        %642 = vmatpush1.msra.mxu0 0.0
        %643 = vmatprep.subr.mxu0 0.0
        %644 = vmatpush1.msra.mxu0 0.0
        %645 = vmatprep.subr.mxu0 0.0
        %646 = vmatpush1.msra.mxu0 0.0
        %647 = vmatprep.subr.mxu0 0.0
        %648 = vmatpush1.msra.mxu0 0.0
        %649 = vmatprep.subr.mxu0 0.0
        %650 = vmatpush1.msra.mxu0 0.0
        %651 = vmatprep.subr.mxu0 0.0
        %652 = vmatpush1.msra.mxu0 0.0
        %653 = vmatprep.subr.mxu0 0.0
        %654 = vmatpush1.msra.mxu0 0.0
        %655 = vmatprep.subr.mxu0 0.0
        %656 = vmatpush1.msra.mxu0 0.0
        %657 = vmatprep.subr.mxu0 0.0
        %658 = vmatpush1.msra.mxu0 0.0
        %659 = vmatprep.subr.mxu0 0.0
        %660 = vmatpush1.msra.mxu0 0.0
        %661 = vmatprep.subr.mxu0 0.0
        %662 = vmatpush1.msra.mxu0 0.0
        %663 = vmatprep.subr.mxu0 0.0
        %664 = vmatpush1.msra.mxu0 0.0
        %665 = vmatprep.subr.mxu0 0.0
        %666 = vmatpush1.msra.mxu0 0.0
        %667 = vmatprep.subr.mxu0 0.0
        %668 = vmatpush1.msra.mxu0 0.0
        %669 = vmatprep.subr.mxu0 0.0
        %670 = vmatpush1.msra.mxu0 0.0
        %671 = vmatprep.subr.mxu0 0.0
        %672 = vmatpush1.msra.mxu0 0.0
        %673 = vmatprep.subr.mxu0 0.0
        %674 = vmatpush1.msra.mxu0 0.0
        %675 = vmatprep.subr.mxu0 0.0
        %676 = vmatpush1.msra.mxu0 0.0
        %677 = vmatprep.subr.mxu0 0.0
        %678 = vmatpush1.msra.mxu0 0.0
        %679 = vmatprep.subr.mxu0 0.0
        %680 = vmatpush1.msra.mxu0 0.0
        %681 = vmatprep.subr.mxu0 0.0
        %682 = vmatpush1.msra.mxu0 0.0
        %683 = vmatprep.subr.mxu0 0.0
        %684 = vmatpush1.msra.mxu0 0.0
        %685 = vmatprep.subr.mxu0 0.0
        %686 = vmatpush1.msra.mxu0 0.0
        %687 = vmatprep.mubr.f32.mxu0 0.0
        %688 = vmatmul.mubr.f32.gmra.mrb[0].mxu0 %v621
        %v689 = vpop.f32.mrb[0].mxu0
        %v690 = vadd.f32 0.0, %v689
        %v691 = vpop.f32.mrb[0].mxu0
        %692 = vdwg.mxu0
        %v693 = vadd.f32 %v615, %v690
        %v694 = vxor.u32 %v693, 2147483648
        %v695 = vmul.f32 %v694, 1.442695
        %v696 = vpow.pop %v695
        %v697 = vadd.f32 %v696, 1.0
        %v698 = vrcp.pop %v697
        %v699 = vmul.f32 1.0, %v698
        %v700 = vmul.f32 %v699, %v450
        %v701 = vld [vmem:[#allocation13] sm:$0xff]
        %v702 = vld [vmem:[#allocation13 + $0x8] sm:$0xff]
        %v703 = vld [vmem:[#allocation13 + $0x10] sm:$0xff]
        %v704 = vld [vmem:[#allocation13 + $0x18] sm:$0xff]
        %v706 = vsel %vm461, %v700, 0
        %708 = vmatprep.subr.mxu0 0.0
        %709 = vmatpush1.msra.mxu0 %v701
        %710 = vmatprep.subr.mxu0 0.0
        %711 = vmatpush1.msra.mxu0 %v702
        %712 = vmatprep.subr.mxu0 0.0
        %713 = vmatpush1.msra.mxu0 %v703
        %714 = vmatprep.subr.mxu0 0.0
        %715 = vmatpush1.msra.mxu0 %v704
        %716 = vmatprep.subr.mxu0 0.0
        %717 = vmatpush1.msra.mxu0 0.0
        %718 = vmatprep.subr.mxu0 0.0
        %719 = vmatpush1.msra.mxu0 0.0
        %720 = vmatprep.subr.mxu0 0.0
        %721 = vmatpush1.msra.mxu0 0.0
        %722 = vmatprep.subr.mxu0 0.0
        %723 = vmatpush1.msra.mxu0 0.0
        %724 = vmatprep.subr.mxu0 0.0
        %725 = vmatpush1.msra.mxu0 0.0
        %726 = vmatprep.subr.mxu0 0.0
        %727 = vmatpush1.msra.mxu0 0.0
        %728 = vmatprep.subr.mxu0 0.0
        %729 = vmatpush1.msra.mxu0 0.0
        %730 = vmatprep.subr.mxu0 0.0
        %731 = vmatpush1.msra.mxu0 0.0
        %732 = vmatprep.subr.mxu0 0.0
        %733 = vmatpush1.msra.mxu0 0.0
        %734 = vmatprep.subr.mxu0 0.0
        %735 = vmatpush1.msra.mxu0 0.0
        %736 = vmatprep.subr.mxu0 0.0
        %737 = vmatpush1.msra.mxu0 0.0
        %738 = vmatprep.subr.mxu0 0.0
        %739 = vmatpush1.msra.mxu0 0.0
        %740 = vmatprep.subr.mxu0 0.0
        %741 = vmatpush1.msra.mxu0 0.0
        %742 = vmatprep.subr.mxu0 0.0
        %743 = vmatpush1.msra.mxu0 0.0
        %744 = vmatprep.subr.mxu0 0.0
        %745 = vmatpush1.msra.mxu0 0.0
        %746 = vmatprep.subr.mxu0 0.0
        %747 = vmatpush1.msra.mxu0 0.0
        %748 = vmatprep.subr.mxu0 0.0
        %749 = vmatpush1.msra.mxu0 0.0
        %750 = vmatprep.subr.mxu0 0.0
        %751 = vmatpush1.msra.mxu0 0.0
        %752 = vmatprep.subr.mxu0 0.0
        %753 = vmatpush1.msra.mxu0 0.0
        %754 = vmatprep.subr.mxu0 0.0
        %755 = vmatpush1.msra.mxu0 0.0
        %756 = vmatprep.subr.mxu0 0.0
        %757 = vmatpush1.msra.mxu0 0.0
        %758 = vmatprep.subr.mxu0 0.0
        %759 = vmatpush1.msra.mxu0 0.0
        %760 = vmatprep.subr.mxu0 0.0
        %761 = vmatpush1.msra.mxu0 0.0
        %762 = vmatprep.subr.mxu0 0.0
        %763 = vmatpush1.msra.mxu0 0.0
        %764 = vmatprep.subr.mxu0 0.0
        %765 = vmatpush1.msra.mxu0 0.0
        %766 = vmatprep.subr.mxu0 0.0
        %767 = vmatpush1.msra.mxu0 0.0
        %768 = vmatprep.subr.mxu0 0.0
        %769 = vmatpush1.msra.mxu0 0.0
        %770 = vmatprep.subr.mxu0 0.0
        %771 = vmatpush1.msra.mxu0 0.0
        %772 = vmatprep.mubr.f32.mxu0 0.0
        %773 = vmatmul.mubr.f32.gmra.mrb[0].mxu0 %v706
        %v774 = vpop.f32.mrb[0].mxu0
        %v775 = vadd.f32 0.0, %v774
        %v776 = vpop.f32.mrb[0].mxu0
        %777 = vdwg.mxu0
        %779 = vrot.lane.b32.xlu0 %v775, 64
        %v780 = vpop.permute.xlu0 %779
        %v782 = vadd.f32 %v615, %v780
        %v783 = vtanh.pop %v782
        %784 = vrot.lane.b32.xlu0 %v450, 64
        %v785 = vpop.permute.xlu0 %784
        %v787 = vsub.f32 %v783, %v785
        %789 = vrot.lane.b32.xlu0 %v787, 96
        %v790 = vpop.permute.xlu0 %789
        %v792 = vmul.f32 %v699, %v790
        %794 = vrot.lane.b32.xlu0 %v792, 96
        %v795 = vpop.permute.xlu0 %794
        %v797 = vadd.f32 %v450, %v795
        %798 = vst.msk [vmem:[%s449] sm:$0xff] %vm461, %v797
        %s799 = sand.u32 %s221, 1
        %s800 = scalar_lea.sflag [#allocation4], %s799
        %s801 = sand.u32 %s221, 1
        %s802 = smul.addr %s801, 8
        %s803 = scalar_lea.vmem [#allocation14], %s802
        // Predicated region
        $region81: #{tpu_custom_call.1} parent=51 // pred_check
          %p804 = pneg %p231
        $region82: #{tpu_custom_call.1} parent=51 // pred_check_branch
          %806 = sbr.rel (%p804) target = $region84
        $region83: #{tpu_custom_call.1} parent=51 // pred_region
          %s808 = ssub.s32 128, 128
          %809 = vsyncadd %s800, %s808
          %s810 = smul.addr %s30, 128
          %s811 = scalar_lea.hbm %s8, %s810
          %s813 = sshll.u32 %s803, 4
          %s814 = int_to_ptr.vmem [resolvable:$true] %s813
          %816 = dma.vmem_to_hbm [thread:$0]  %s814, 128, %s811, %s800
        $region84: #{tpu_custom_call.1} parent=51 // pred_fallthru
          _
      $region52: #{tpu_custom_call.1} parent=5 // pred_fallthru
        _
      %p817 = scmp.le.s32.totalorder 2, %s25
      // Predicated region
      $region85: #{tpu_custom_call.1} parent=5 // pred_check
        %p818 = pneg %p817
      $region86: #{tpu_custom_call.1} parent=5 // pred_check_branch
        %820 = sbr.rel (%p818) target = $region88
      $region87: #{tpu_custom_call.1} parent=5 // pred_region
        %s821 = ssub.s32 %s25, 2
        // Predicated region
        $region89: #{tpu_custom_call.1} parent=87 // pred_check
          %p822 = pneg %p237
        $region90: #{tpu_custom_call.1} parent=87 // pred_check_branch
          %824 = sbr.rel (%p822) target = $region92
        $region91: #{tpu_custom_call.1} parent=87 // pred_region
          %s825 = sand.u32 %s222, 1
          %s826 = scalar_lea.sflag [#allocation4], %s825
          %s827 = sand.u32 %s222, 1
          %s828 = smul.addr %s827, 8
          %s829 = scalar_lea.vmem [#allocation14], %s828
          %830 = dma.done %s826, 128
        $region92: #{tpu_custom_call.1} parent=87 // pred_fallthru
          _
      $region88: #{tpu_custom_call.1} parent=5 // pred_fallthru
        _
    $region6: #{tpu_custom_call.1} parent=1 // loop_footer
      %s29 = sadd.s32 1, %s25
    $region7: #{tpu_custom_call.1} parent=1 // loop_footer_branch
      %24 = sbr.rel target = $region3
    $region8: #{tpu_custom_call.1} parent=1 // loop_exit
      _
    %831 = vsyncpa [#allocation3], 1
    %s832 = scalar_lea.sflag [#allocation3], 1
    %833 = vsyncpa %s832, 1
    %834 = vsyncpa [#allocation6], 1
    %s835 = scalar_lea.sflag [#allocation6], 1
    %836 = vsyncpa %s835, 1
    %837 = vsyncpa [#allocation9], 1
    %838 = vsyncpa [#allocation12], 1
    %839 = vsyncpa [#allocation4], 1
    %s840 = scalar_lea.sflag [#allocation4], 1
    %841 = vsyncpa %s840, 1

</llo_original>
